<compile_context>
chip_gen: v6e
topology: v6e:2x2x1
jax: 0.10.0
libtpu: 0.0.40
codegen_flags: <defaults>
</compile_context>

<pallas_src>
import jax
import jax.numpy as jnp
from jax import lax
from jax.experimental import pallas as pl
from jax.experimental.pallas import tpu as pltpu


# ----------------------------------------------------------------------------
# LSTM kernel: single invocation, everything resident in VMEM.
# ----------------------------------------------------------------------------
def lstm_kernel(x_ref, wih_ref, whh_ref, b_ref, h0_ref, c0_ref,
                out_ref, gx_ref):
    SB = x_ref.shape[0]
    B, H = h0_ref.shape
    S = SB // B

    # Hoisted lane masks (computed once).  Gate layout along lanes: [i|f|g|o].
    lane_r = lax.broadcasted_iota(jnp.int32, (1, 4 * H), 1)
    half_r = jnp.where((lane_r >= 2 * H) & (lane_r < 3 * H),
                       1.0, 0.5).astype(jnp.float32)            # (1, 4H)
    lane_b = lax.broadcasted_iota(jnp.int32, (B, 4 * H), 1)
    is_g_b = (lane_b >= 2 * H) & (lane_b < 3 * H)                # (B, 4H)

    # (1) Hoisted input projection + bias for ALL time steps (one MXU matmul),
    #     pre-scaled so each step's activation is a single full-vreg tanh.
    gx_ref[...] = (jnp.dot(x_ref[...], wih_ref[...],
                           preferred_element_type=jnp.float32)
                   + b_ref[...]) * half_r                        # (S*B, 4H)

    # (2) W_hh loaded + pre-scaled once; closed over by the loop body.
    whh_s = whh_ref[...] * half_r                                # (H, 4H)

    # (3) Sequential recurrence; h/c carried as values (vregs).
    def step(t, carry):
        h, c = carry
        row = t * B
        if B % 8 == 0:
            row = pl.multiple_of(row, 8)          # aligned sublane access

        pre = gx_ref[pl.ds(row, B), :] + jnp.dot(
            h, whh_s, preferred_element_type=jnp.float32)        # (B, 4H)

        t_all = jnp.tanh(pre)                                    # 1 EUP op
        act = jnp.where(is_g_b, t_all, 0.5 * (t_all + 1.0))      # sigmoid i/f/o

        i_t = act[:, 0 * H:1 * H]
        f_t = act[:, 1 * H:2 * H]
        g_t = act[:, 2 * H:3 * H]
        o_t = act[:, 3 * H:4 * H]

        c_new = f_t * c + i_t * g_t
        h_new = o_t * jnp.tanh(c_new)                            # 2nd EUP op

        out_ref[pl.ds(row, B), :] = h_new                        # hidden_seq[t]
        return h_new, c_new

    unroll = True if S <= 16 else 8
    _, c_T = lax.fori_loop(0, S, step, (h0_ref[...], c0_ref[...]),
                           unroll=unroll)

    # (4) c_T packed into the tail rows of the single output
    #     (h_T is hidden_seq[-1], sliced for free in the wrapper).
    out_ref[pl.ds(S * B, B), :] = c_T


def my_lstm_forward(x, w_ih, w_hh, bias, hidden=None):
    """MyLSTM.forward: returns (hidden_seq (S,B,H), (h_t, c_t))."""
    S, B, E = x.shape
    H = w_hh.shape[0]

    if hidden is None:
        h0 = jnp.zeros((B, H), jnp.float32)
        c0 = jnp.zeros((B, H), jnp.float32)
    else:
        h0, c0 = hidden
        h0 = jnp.broadcast_to(h0, (B, H)).astype(jnp.float32)
        c0 = jnp.broadcast_to(c0, (B, H)).astype(jnp.float32)

    x_flat = x.reshape(S * B, E).astype(jnp.float32)     # free reshape (glue)
    b2 = bias.reshape(1, 4 * H).astype(jnp.float32)

    vmem = pl.BlockSpec(memory_space=pltpu.MemorySpace.VMEM)

    packed = pl.pallas_call(
        lstm_kernel,
        out_shape=jax.ShapeDtypeStruct(((S + 1) * B, H), jnp.float32),
        in_specs=[vmem] * 6,
        out_specs=vmem,
        scratch_shapes=[pltpu.VMEM((S * B, 4 * H), jnp.float32)],  # gates_x
    )(x_flat, w_ih.astype(jnp.float32), w_hh.astype(jnp.float32), b2, h0, c0)

    hidden_seq = packed[:S * B].reshape(S, B, H)
    h_t = hidden_seq[S - 1]          # final hidden state == last seq entry
    c_t = packed[S * B:]             # final cell state (packed tail rows)
    return hidden_seq, (h_t, c_t)


# ----------------------------------------------------------------------------
# Pure-JAX reference (mirrors the PyTorch forward) for verification.
# ----------------------------------------------------------------------------
def reference_forward(x, w_ih, w_hh, bias, hidden=None):
    S, B, E = x.shape
    H = w_hh.shape[0]
    if hidden is None:
        h0 = jnp.zeros((B, H), jnp.float32)
        c0 = jnp.zeros((B, H), jnp.float32)
    else:
        h0, c0 = hidden

    def step(carry, x_t):
        h, c = carry
        gates = (jnp.dot(x_t, w_ih, preferred_element_type=jnp.float32)
                 + jnp.dot(h, w_hh, preferred_element_type=jnp.float32)
                 + bias)
        i_t = jax.nn.sigmoid(gates[:, :H])
        f_t = jax.nn.sigmoid(gates[:, H:2 * H])
        g_t = jnp.tanh(gates[:, 2 * H:3 * H])
        o_t = jax.nn.sigmoid(gates[:, 3 * H:4 * H])
        c_new = f_t * c + i_t * g_t
        h_new = o_t * jnp.tanh(c_new)
        return (h_new, c_new), h_new

    (h_t, c_t), seq = lax.scan(step, (h0, c0), x)
    return seq, (h_t, c_t)


def xavier_uniform(key, shape):
    fan_in, fan_out = shape[0], shape[1]
    bound = (6.0 / (fan_in + fan_out)) ** 0.5
    return jax.random.uniform(key, shape, jnp.float32, -bound, bound)


if __name__ == "__main__":
    # seq=8, batch=8 (fills all 8 f32 sublanes), input_dim=16, hidden=32
    # (so 4*hidden = 128 exactly fills the lane dimension).
    seq_len, batch_size, input_dim, hidden_dim = 8, 8, 16, 32

    key = jax.random.PRNGKey(0)
    k_x, k_ih, k_hh, k_b = jax.random.split(key, 4)

    w_ih = xavier_uniform(k_ih, (input_dim, 4 * hidden_dim))
    w_hh = xavier_uniform(k_hh, (hidden_dim, 4 * hidden_dim))
    bias = jax.random.uniform(k_b, (4 * hidden_dim,), jnp.float32, -0.05, 0.05)
    x = jax.random.normal(k_x, (seq_len, batch_size, input_dim), jnp.float32)

    hidden_seq, (h_t, c_t) = my_lstm_forward(x, w_ih, w_hh, bias)
    hidden_seq = jax.block_until_ready(hidden_seq)
    h_t = jax.block_until_ready(h_t)
    c_t = jax.block_until_ready(c_t)

    ref_seq, (ref_h, ref_c) = reference_forward(x, w_ih, w_hh, bias)

    assert hidden_seq.shape == (seq_len, batch_size, hidden_dim)
    assert h_t.shape == (batch_size, hidden_dim)
    assert c_t.shape == (batch_size, hidden_dim)
    assert jnp.allclose(hidden_seq, ref_seq, atol=2e-5, rtol=2e-5)
    assert jnp.allclose(h_t, ref_h, atol=2e-5, rtol=2e-5)
    assert jnp.allclose(c_t, ref_c, atol=2e-5, rtol=2e-5)

    print("KERNEL_OK")
</pallas_src>

<mosaic_0001>
module attributes {stable_mosaic.version = 11 : i64} {
  func.func @lstm_kernel(%arg0: memref<64x16xf32, #tpu.memory_space<vmem>>, %arg1: memref<16x128xf32, #tpu.memory_space<vmem>>, %arg2: memref<32x128xf32, #tpu.memory_space<vmem>>, %arg3: memref<1x128xf32, #tpu.memory_space<vmem>>, %arg4: memref<8x32xf32, #tpu.memory_space<vmem>>, %arg5: memref<8x32xf32, #tpu.memory_space<vmem>>, %arg6: memref<72x32xf32, #tpu.memory_space<vmem>>, %arg7: memref<64x128xf32, #tpu.memory_space<vmem>>) attributes {dimension_semantics = [], scalar_prefetch = 0 : i64, scratch_operands = 1 : i64, tpu.core_type = #tpu.core_type<tc>} {
    %0 = tpu.iota {dimensions = array<i32: 1>} : vector<1x128xi32>
    %c64_i32 = arith.constant 64 : i32
    %1 = vector.broadcast %c64_i32 : i32 to vector<1x128xi32>
    %2 = arith.cmpi sge, %0, %1 : vector<1x128xi32>
    %c96_i32 = arith.constant 96 : i32
    %3 = vector.broadcast %c96_i32 : i32 to vector<1x128xi32>
    %4 = arith.cmpi slt, %0, %3 : vector<1x128xi32>
    %5 = arith.andi %2, %4 : vector<1x128xi1>
    %cst = arith.constant 1.000000e+00 : f32
    %cst_0 = arith.constant 5.000000e-01 : f32
    %6 = vector.broadcast %cst : f32 to vector<1x128xf32>
    %7 = vector.broadcast %cst_0 : f32 to vector<1x128xf32>
    %8 = arith.select %5, %6, %7 : vector<1x128xi1>, vector<1x128xf32>
    %9 = tpu.iota {dimensions = array<i32: 1>} : vector<8x128xi32>
    %c64_i32_1 = arith.constant 64 : i32
    %10 = vector.broadcast %c64_i32_1 : i32 to vector<8x128xi32>
    %11 = arith.cmpi sge, %9, %10 : vector<8x128xi32>
    %c96_i32_2 = arith.constant 96 : i32
    %12 = vector.broadcast %c96_i32_2 : i32 to vector<8x128xi32>
    %13 = arith.cmpi slt, %9, %12 : vector<8x128xi32>
    %14 = arith.andi %11, %13 : vector<8x128xi1>
    %c0 = arith.constant 0 : index
    %c0_3 = arith.constant 0 : index
    %15 = vector.load %arg0[%c0, %c0_3] : memref<64x16xf32, #tpu.memory_space<vmem>>, vector<64x16xf32>
    %c0_4 = arith.constant 0 : index
    %c0_5 = arith.constant 0 : index
    %16 = vector.load %arg1[%c0_4, %c0_5] : memref<16x128xf32, #tpu.memory_space<vmem>>, vector<16x128xf32>
    %cst_6 = arith.constant dense<0.000000e+00> : vector<64x128xf32>
    %17 = tpu.matmul %15, %16, %cst_6 {dimension_numbers = #tpu.dot_dimension_numbers<[1], [0], [0], [1], [0, 0, 1, 1], [], []>} : vector<64x16xf32>, vector<16x128xf32>, vector<64x128xf32> -> vector<64x128xf32>
    %c0_7 = arith.constant 0 : index
    %c0_8 = arith.constant 0 : index
    %18 = vector.load %arg3[%c0_7, %c0_8] : memref<1x128xf32, #tpu.memory_space<vmem>>, vector<1x128xf32>
    %19 = vector.broadcast %18 : vector<1x128xf32> to vector<64x128xf32>
    %20 = arith.addf %17, %19 : vector<64x128xf32>
    %21 = vector.broadcast %8 : vector<1x128xf32> to vector<64x128xf32>
    %22 = arith.mulf %20, %21 : vector<64x128xf32>
    %c0_9 = arith.constant 0 : index
    %c0_10 = arith.constant 0 : index
    %23 = vector.load %arg7[%c0_9, %c0_10] : memref<64x128xf32, #tpu.memory_space<vmem>>, vector<64x128xf32>
    tpu.vector_store %arg7[%c0_9, %c0_10], %22 {strides = array<i32>} : memref<64x128xf32, #tpu.memory_space<vmem>>, vector<64x128xf32>,
    %c0_11 = arith.constant 0 : index
    %c0_12 = arith.constant 0 : index
    %24 = vector.load %arg2[%c0_11, %c0_12] : memref<32x128xf32, #tpu.memory_space<vmem>>, vector<32x128xf32>
    %25 = vector.broadcast %8 : vector<1x128xf32> to vector<32x128xf32>
    %26 = arith.mulf %24, %25 : vector<32x128xf32>
    %c0_13 = arith.constant 0 : index
    %c0_14 = arith.constant 0 : index
    %27 = vector.load %arg4[%c0_13, %c0_14] : memref<8x32xf32, #tpu.memory_space<vmem>>, vector<8x32xf32>
    %c0_15 = arith.constant 0 : index
    %c0_16 = arith.constant 0 : index
    %28 = vector.load %arg5[%c0_15, %c0_16] : memref<8x32xf32, #tpu.memory_space<vmem>>, vector<8x32xf32>
    %c0_i32 = arith.constant 0 : i32
    %c8_i32 = arith.constant 8 : i32
    %29 = arith.muli %c0_i32, %c8_i32 : i32
    %30 = tpu.assume_multiple %29, 8 : i32
    %31 = arith.index_cast %30 : i32 to index
    %c0_17 = arith.constant 0 : index
    %32 = vector.load %arg7[%31, %c0_17] : memref<64x128xf32, #tpu.memory_space<vmem>>, vector<8x128xf32>
    %cst_18 = arith.constant dense<0.000000e+00> : vector<8x128xf32>
    %33 = tpu.matmul %27, %26, %cst_18 {dimension_numbers = #tpu.dot_dimension_numbers<[1], [0], [0], [1], [0, 0, 1, 1], [], []>} : vector<8x32xf32>, vector<32x128xf32>, vector<8x128xf32> -> vector<8x128xf32>
    %34 = arith.addf %32, %33 : vector<8x128xf32>
    %35 = math.tanh %34 : vector<8x128xf32>
    %cst_19 = arith.constant 1.000000e+00 : f32
    %36 = vector.broadcast %cst_19 : f32 to vector<8x128xf32>
    %37 = arith.addf %35, %36 : vector<8x128xf32>
    %cst_20 = arith.constant 5.000000e-01 : f32
    %38 = vector.broadcast %cst_20 : f32 to vector<8x128xf32>
    %39 = arith.mulf %38, %37 : vector<8x128xf32>
    %40 = arith.select %14, %35, %39 : vector<8x128xi1>, vector<8x128xf32>
    %41 = vector.extract_strided_slice %40 {offsets = [0, 0], sizes = [8, 32], strides = [1, 1]} : vector<8x128xf32> to vector<8x32xf32>
    %42 = vector.extract_strided_slice %40 {offsets = [0, 32], sizes = [8, 32], strides = [1, 1]} : vector<8x128xf32> to vector<8x32xf32>
    %43 = vector.extract_strided_slice %40 {offsets = [0, 64], sizes = [8, 32], strides = [1, 1]} : vector<8x128xf32> to vector<8x32xf32>
    %44 = vector.extract_strided_slice %40 {offsets = [0, 96], sizes = [8, 32], strides = [1, 1]} : vector<8x128xf32> to vector<8x32xf32>
    %45 = arith.mulf %42, %28 : vector<8x32xf32>
    %46 = arith.mulf %41, %43 : vector<8x32xf32>
    %47 = arith.addf %45, %46 : vector<8x32xf32>
    %48 = math.tanh %47 : vector<8x32xf32>
    %49 = arith.mulf %44, %48 : vector<8x32xf32>
    %50 = arith.index_cast %30 : i32 to index
    %c0_21 = arith.constant 0 : index
    %51 = vector.load %arg6[%50, %c0_21] : memref<72x32xf32, #tpu.memory_space<vmem>>, vector<8x32xf32>
    tpu.vector_store %arg6[%50, %c0_21], %49 {strides = array<i32>} : memref<72x32xf32, #tpu.memory_space<vmem>>, vector<8x32xf32>,
    %c1_i32 = arith.constant 1 : i32
    %c8_i32_22 = arith.constant 8 : i32
    %52 = arith.muli %c1_i32, %c8_i32_22 : i32
    %53 = tpu.assume_multiple %52, 8 : i32
    %54 = arith.index_cast %53 : i32 to index
    %c0_23 = arith.constant 0 : index
    %55 = vector.load %arg7[%54, %c0_23] : memref<64x128xf32, #tpu.memory_space<vmem>>, vector<8x128xf32>
    %cst_24 = arith.constant dense<0.000000e+00> : vector<8x128xf32>
    %56 = tpu.matmul %49, %26, %cst_24 {dimension_numbers = #tpu.dot_dimension_numbers<[1], [0], [0], [1], [0, 0, 1, 1], [], []>} : vector<8x32xf32>, vector<32x128xf32>, vector<8x128xf32> -> vector<8x128xf32>
    %57 = arith.addf %55, %56 : vector<8x128xf32>
    %58 = math.tanh %57 : vector<8x128xf32>
    %cst_25 = arith.constant 1.000000e+00 : f32
    %59 = vector.broadcast %cst_25 : f32 to vector<8x128xf32>
    %60 = arith.addf %58, %59 : vector<8x128xf32>
    %cst_26 = arith.constant 5.000000e-01 : f32
    %61 = vector.broadcast %cst_26 : f32 to vector<8x128xf32>
    %62 = arith.mulf %61, %60 : vector<8x128xf32>
    %63 = arith.select %14, %58, %62 : vector<8x128xi1>, vector<8x128xf32>
    %64 = vector.extract_strided_slice %63 {offsets = [0, 0], sizes = [8, 32], strides = [1, 1]} : vector<8x128xf32> to vector<8x32xf32>
    %65 = vector.extract_strided_slice %63 {offsets = [0, 32], sizes = [8, 32], strides = [1, 1]} : vector<8x128xf32> to vector<8x32xf32>
    %66 = vector.extract_strided_slice %63 {offsets = [0, 64], sizes = [8, 32], strides = [1, 1]} : vector<8x128xf32> to vector<8x32xf32>
    %67 = vector.extract_strided_slice %63 {offsets = [0, 96], sizes = [8, 32], strides = [1, 1]} : vector<8x128xf32> to vector<8x32xf32>
    %68 = arith.mulf %65, %47 : vector<8x32xf32>
    %69 = arith.mulf %64, %66 : vector<8x32xf32>
    %70 = arith.addf %68, %69 : vector<8x32xf32>
    %71 = math.tanh %70 : vector<8x32xf32>
    %72 = arith.mulf %67, %71 : vector<8x32xf32>
    %73 = arith.index_cast %53 : i32 to index
    %c0_27 = arith.constant 0 : index
    %74 = vector.load %arg6[%73, %c0_27] : memref<72x32xf32, #tpu.memory_space<vmem>>, vector<8x32xf32>
    tpu.vector_store %arg6[%73, %c0_27], %72 {strides = array<i32>} : memref<72x32xf32, #tpu.memory_space<vmem>>, vector<8x32xf32>,
    %c2_i32 = arith.constant 2 : i32
    %c8_i32_28 = arith.constant 8 : i32
    %75 = arith.muli %c2_i32, %c8_i32_28 : i32
    %76 = tpu.assume_multiple %75, 8 : i32
    %77 = arith.index_cast %76 : i32 to index
    %c0_29 = arith.constant 0 : index
    %78 = vector.load %arg7[%77, %c0_29] : memref<64x128xf32, #tpu.memory_space<vmem>>, vector<8x128xf32>
    %cst_30 = arith.constant dense<0.000000e+00> : vector<8x128xf32>
    %79 = tpu.matmul %72, %26, %cst_30 {dimension_numbers = #tpu.dot_dimension_numbers<[1], [0], [0], [1], [0, 0, 1, 1], [], []>} : vector<8x32xf32>, vector<32x128xf32>, vector<8x128xf32> -> vector<8x128xf32>
    %80 = arith.addf %78, %79 : vector<8x128xf32>
    %81 = math.tanh %80 : vector<8x128xf32>
    %cst_31 = arith.constant 1.000000e+00 : f32
    %82 = vector.broadcast %cst_31 : f32 to vector<8x128xf32>
    %83 = arith.addf %81, %82 : vector<8x128xf32>
    %cst_32 = arith.constant 5.000000e-01 : f32
    %84 = vector.broadcast %cst_32 : f32 to vector<8x128xf32>
    %85 = arith.mulf %84, %83 : vector<8x128xf32>
    %86 = arith.select %14, %81, %85 : vector<8x128xi1>, vector<8x128xf32>
    %87 = vector.extract_strided_slice %86 {offsets = [0, 0], sizes = [8, 32], strides = [1, 1]} : vector<8x128xf32> to vector<8x32xf32>
    %88 = vector.extract_strided_slice %86 {offsets = [0, 32], sizes = [8, 32], strides = [1, 1]} : vector<8x128xf32> to vector<8x32xf32>
    %89 = vector.extract_strided_slice %86 {offsets = [0, 64], sizes = [8, 32], strides = [1, 1]} : vector<8x128xf32> to vector<8x32xf32>
    %90 = vector.extract_strided_slice %86 {offsets = [0, 96], sizes = [8, 32], strides = [1, 1]} : vector<8x128xf32> to vector<8x32xf32>
    %91 = arith.mulf %88, %70 : vector<8x32xf32>
    %92 = arith.mulf %87, %89 : vector<8x32xf32>
    %93 = arith.addf %91, %92 : vector<8x32xf32>
    %94 = math.tanh %93 : vector<8x32xf32>
    %95 = arith.mulf %90, %94 : vector<8x32xf32>
    %96 = arith.index_cast %76 : i32 to index
    %c0_33 = arith.constant 0 : index
    %97 = vector.load %arg6[%96, %c0_33] : memref<72x32xf32, #tpu.memory_space<vmem>>, vector<8x32xf32>
    tpu.vector_store %arg6[%96, %c0_33], %95 {strides = array<i32>} : memref<72x32xf32, #tpu.memory_space<vmem>>, vector<8x32xf32>,
    %c3_i32 = arith.constant 3 : i32
    %c8_i32_34 = arith.constant 8 : i32
    %98 = arith.muli %c3_i32, %c8_i32_34 : i32
    %99 = tpu.assume_multiple %98, 8 : i32
    %100 = arith.index_cast %99 : i32 to index
    %c0_35 = arith.constant 0 : index
    %101 = vector.load %arg7[%100, %c0_35] : memref<64x128xf32, #tpu.memory_space<vmem>>, vector<8x128xf32>
    %cst_36 = arith.constant dense<0.000000e+00> : vector<8x128xf32>
    %102 = tpu.matmul %95, %26, %cst_36 {dimension_numbers = #tpu.dot_dimension_numbers<[1], [0], [0], [1], [0, 0, 1, 1], [], []>} : vector<8x32xf32>, vector<32x128xf32>, vector<8x128xf32> -> vector<8x128xf32>
    %103 = arith.addf %101, %102 : vector<8x128xf32>
    %104 = math.tanh %103 : vector<8x128xf32>
    %cst_37 = arith.constant 1.000000e+00 : f32
    %105 = vector.broadcast %cst_37 : f32 to vector<8x128xf32>
    %106 = arith.addf %104, %105 : vector<8x128xf32>
    %cst_38 = arith.constant 5.000000e-01 : f32
    %107 = vector.broadcast %cst_38 : f32 to vector<8x128xf32>
    %108 = arith.mulf %107, %106 : vector<8x128xf32>
    %109 = arith.select %14, %104, %108 : vector<8x128xi1>, vector<8x128xf32>
    %110 = vector.extract_strided_slice %109 {offsets = [0, 0], sizes = [8, 32], strides = [1, 1]} : vector<8x128xf32> to vector<8x32xf32>
    %111 = vector.extract_strided_slice %109 {offsets = [0, 32], sizes = [8, 32], strides = [1, 1]} : vector<8x128xf32> to vector<8x32xf32>
    %112 = vector.extract_strided_slice %109 {offsets = [0, 64], sizes = [8, 32], strides = [1, 1]} : vector<8x128xf32> to vector<8x32xf32>
    %113 = vector.extract_strided_slice %109 {offsets = [0, 96], sizes = [8, 32], strides = [1, 1]} : vector<8x128xf32> to vector<8x32xf32>
    %114 = arith.mulf %111, %93 : vector<8x32xf32>
    %115 = arith.mulf %110, %112 : vector<8x32xf32>
    %116 = arith.addf %114, %115 : vector<8x32xf32>
    %117 = math.tanh %116 : vector<8x32xf32>
    %118 = arith.mulf %113, %117 : vector<8x32xf32>
    %119 = arith.index_cast %99 : i32 to index
    %c0_39 = arith.constant 0 : index
    %120 = vector.load %arg6[%119, %c0_39] : memref<72x32xf32, #tpu.memory_space<vmem>>, vector<8x32xf32>
    tpu.vector_store %arg6[%119, %c0_39], %118 {strides = array<i32>} : memref<72x32xf32, #tpu.memory_space<vmem>>, vector<8x32xf32>,
    %c4_i32 = arith.constant 4 : i32
    %c8_i32_40 = arith.constant 8 : i32
    %121 = arith.muli %c4_i32, %c8_i32_40 : i32
    %122 = tpu.assume_multiple %121, 8 : i32
    %123 = arith.index_cast %122 : i32 to index
    %c0_41 = arith.constant 0 : index
    %124 = vector.load %arg7[%123, %c0_41] : memref<64x128xf32, #tpu.memory_space<vmem>>, vector<8x128xf32>
    %cst_42 = arith.constant dense<0.000000e+00> : vector<8x128xf32>
    %125 = tpu.matmul %118, %26, %cst_42 {dimension_numbers = #tpu.dot_dimension_numbers<[1], [0], [0], [1], [0, 0, 1, 1], [], []>} : vector<8x32xf32>, vector<32x128xf32>, vector<8x128xf32> -> vector<8x128xf32>
    %126 = arith.addf %124, %125 : vector<8x128xf32>
    %127 = math.tanh %126 : vector<8x128xf32>
    %cst_43 = arith.constant 1.000000e+00 : f32
    %128 = vector.broadcast %cst_43 : f32 to vector<8x128xf32>
    %129 = arith.addf %127, %128 : vector<8x128xf32>
    %cst_44 = arith.constant 5.000000e-01 : f32
    %130 = vector.broadcast %cst_44 : f32 to vector<8x128xf32>
    %131 = arith.mulf %130, %129 : vector<8x128xf32>
    %132 = arith.select %14, %127, %131 : vector<8x128xi1>, vector<8x128xf32>
    %133 = vector.extract_strided_slice %132 {offsets = [0, 0], sizes = [8, 32], strides = [1, 1]} : vector<8x128xf32> to vector<8x32xf32>
    %134 = vector.extract_strided_slice %132 {offsets = [0, 32], sizes = [8, 32], strides = [1, 1]} : vector<8x128xf32> to vector<8x32xf32>
    %135 = vector.extract_strided_slice %132 {offsets = [0, 64], sizes = [8, 32], strides = [1, 1]} : vector<8x128xf32> to vector<8x32xf32>
    %136 = vector.extract_strided_slice %132 {offsets = [0, 96], sizes = [8, 32], strides = [1, 1]} : vector<8x128xf32> to vector<8x32xf32>
    %137 = arith.mulf %134, %116 : vector<8x32xf32>
    %138 = arith.mulf %133, %135 : vector<8x32xf32>
    %139 = arith.addf %137, %138 : vector<8x32xf32>
    %140 = math.tanh %139 : vector<8x32xf32>
    %141 = arith.mulf %136, %140 : vector<8x32xf32>
    %142 = arith.index_cast %122 : i32 to index
    %c0_45 = arith.constant 0 : index
    %143 = vector.load %arg6[%142, %c0_45] : memref<72x32xf32, #tpu.memory_space<vmem>>, vector<8x32xf32>
    tpu.vector_store %arg6[%142, %c0_45], %141 {strides = array<i32>} : memref<72x32xf32, #tpu.memory_space<vmem>>, vector<8x32xf32>,
    %c5_i32 = arith.constant 5 : i32
    %c8_i32_46 = arith.constant 8 : i32
    %144 = arith.muli %c5_i32, %c8_i32_46 : i32
    %145 = tpu.assume_multiple %144, 8 : i32
    %146 = arith.index_cast %145 : i32 to index
    %c0_47 = arith.constant 0 : index
    %147 = vector.load %arg7[%146, %c0_47] : memref<64x128xf32, #tpu.memory_space<vmem>>, vector<8x128xf32>
    %cst_48 = arith.constant dense<0.000000e+00> : vector<8x128xf32>
    %148 = tpu.matmul %141, %26, %cst_48 {dimension_numbers = #tpu.dot_dimension_numbers<[1], [0], [0], [1], [0, 0, 1, 1], [], []>} : vector<8x32xf32>, vector<32x128xf32>, vector<8x128xf32> -> vector<8x128xf32>
    %149 = arith.addf %147, %148 : vector<8x128xf32>
    %150 = math.tanh %149 : vector<8x128xf32>
    %cst_49 = arith.constant 1.000000e+00 : f32
    %151 = vector.broadcast %cst_49 : f32 to vector<8x128xf32>
    %152 = arith.addf %150, %151 : vector<8x128xf32>
    %cst_50 = arith.constant 5.000000e-01 : f32
    %153 = vector.broadcast %cst_50 : f32 to vector<8x128xf32>
    %154 = arith.mulf %153, %152 : vector<8x128xf32>
    %155 = arith.select %14, %150, %154 : vector<8x128xi1>, vector<8x128xf32>
    %156 = vector.extract_strided_slice %155 {offsets = [0, 0], sizes = [8, 32], strides = [1, 1]} : vector<8x128xf32> to vector<8x32xf32>
    %157 = vector.extract_strided_slice %155 {offsets = [0, 32], sizes = [8, 32], strides = [1, 1]} : vector<8x128xf32> to vector<8x32xf32>
    %158 = vector.extract_strided_slice %155 {offsets = [0, 64], sizes = [8, 32], strides = [1, 1]} : vector<8x128xf32> to vector<8x32xf32>
    %159 = vector.extract_strided_slice %155 {offsets = [0, 96], sizes = [8, 32], strides = [1, 1]} : vector<8x128xf32> to vector<8x32xf32>
    %160 = arith.mulf %157, %139 : vector<8x32xf32>
    %161 = arith.mulf %156, %158 : vector<8x32xf32>
    %162 = arith.addf %160, %161 : vector<8x32xf32>
    %163 = math.tanh %162 : vector<8x32xf32>
    %164 = arith.mulf %159, %163 : vector<8x32xf32>
    %165 = arith.index_cast %145 : i32 to index
    %c0_51 = arith.constant 0 : index
    %166 = vector.load %arg6[%165, %c0_51] : memref<72x32xf32, #tpu.memory_space<vmem>>, vector<8x32xf32>
    tpu.vector_store %arg6[%165, %c0_51], %164 {strides = array<i32>} : memref<72x32xf32, #tpu.memory_space<vmem>>, vector<8x32xf32>,
    %c6_i32 = arith.constant 6 : i32
    %c8_i32_52 = arith.constant 8 : i32
    %167 = arith.muli %c6_i32, %c8_i32_52 : i32
    %168 = tpu.assume_multiple %167, 8 : i32
    %169 = arith.index_cast %168 : i32 to index
    %c0_53 = arith.constant 0 : index
    %170 = vector.load %arg7[%169, %c0_53] : memref<64x128xf32, #tpu.memory_space<vmem>>, vector<8x128xf32>
    %cst_54 = arith.constant dense<0.000000e+00> : vector<8x128xf32>
    %171 = tpu.matmul %164, %26, %cst_54 {dimension_numbers = #tpu.dot_dimension_numbers<[1], [0], [0], [1], [0, 0, 1, 1], [], []>} : vector<8x32xf32>, vector<32x128xf32>, vector<8x128xf32> -> vector<8x128xf32>
    %172 = arith.addf %170, %171 : vector<8x128xf32>
    %173 = math.tanh %172 : vector<8x128xf32>
    %cst_55 = arith.constant 1.000000e+00 : f32
    %174 = vector.broadcast %cst_55 : f32 to vector<8x128xf32>
    %175 = arith.addf %173, %174 : vector<8x128xf32>
    %cst_56 = arith.constant 5.000000e-01 : f32
    %176 = vector.broadcast %cst_56 : f32 to vector<8x128xf32>
    %177 = arith.mulf %176, %175 : vector<8x128xf32>
    %178 = arith.select %14, %173, %177 : vector<8x128xi1>, vector<8x128xf32>
    %179 = vector.extract_strided_slice %178 {offsets = [0, 0], sizes = [8, 32], strides = [1, 1]} : vector<8x128xf32> to vector<8x32xf32>
    %180 = vector.extract_strided_slice %178 {offsets = [0, 32], sizes = [8, 32], strides = [1, 1]} : vector<8x128xf32> to vector<8x32xf32>
    %181 = vector.extract_strided_slice %178 {offsets = [0, 64], sizes = [8, 32], strides = [1, 1]} : vector<8x128xf32> to vector<8x32xf32>
    %182 = vector.extract_strided_slice %178 {offsets = [0, 96], sizes = [8, 32], strides = [1, 1]} : vector<8x128xf32> to vector<8x32xf32>
    %183 = arith.mulf %180, %162 : vector<8x32xf32>
    %184 = arith.mulf %179, %181 : vector<8x32xf32>
    %185 = arith.addf %183, %184 : vector<8x32xf32>
    %186 = math.tanh %185 : vector<8x32xf32>
    %187 = arith.mulf %182, %186 : vector<8x32xf32>
    %188 = arith.index_cast %168 : i32 to index
    %c0_57 = arith.constant 0 : index
    %189 = vector.load %arg6[%188, %c0_57] : memref<72x32xf32, #tpu.memory_space<vmem>>, vector<8x32xf32>
    tpu.vector_store %arg6[%188, %c0_57], %187 {strides = array<i32>} : memref<72x32xf32, #tpu.memory_space<vmem>>, vector<8x32xf32>,
    %c7_i32 = arith.constant 7 : i32
    %c8_i32_58 = arith.constant 8 : i32
    %190 = arith.muli %c7_i32, %c8_i32_58 : i32
    %191 = tpu.assume_multiple %190, 8 : i32
    %192 = arith.index_cast %191 : i32 to index
    %c0_59 = arith.constant 0 : index
    %193 = vector.load %arg7[%192, %c0_59] : memref<64x128xf32, #tpu.memory_space<vmem>>, vector<8x128xf32>
    %cst_60 = arith.constant dense<0.000000e+00> : vector<8x128xf32>
    %194 = tpu.matmul %187, %26, %cst_60 {dimension_numbers = #tpu.dot_dimension_numbers<[1], [0], [0], [1], [0, 0, 1, 1], [], []>} : vector<8x32xf32>, vector<32x128xf32>, vector<8x128xf32> -> vector<8x128xf32>
    %195 = arith.addf %193, %194 : vector<8x128xf32>
    %196 = math.tanh %195 : vector<8x128xf32>
    %cst_61 = arith.constant 1.000000e+00 : f32
    %197 = vector.broadcast %cst_61 : f32 to vector<8x128xf32>
    %198 = arith.addf %196, %197 : vector<8x128xf32>
    %cst_62 = arith.constant 5.000000e-01 : f32
    %199 = vector.broadcast %cst_62 : f32 to vector<8x128xf32>
    %200 = arith.mulf %199, %198 : vector<8x128xf32>
    %201 = arith.select %14, %196, %200 : vector<8x128xi1>, vector<8x128xf32>
    %202 = vector.extract_strided_slice %201 {offsets = [0, 0], sizes = [8, 32], strides = [1, 1]} : vector<8x128xf32> to vector<8x32xf32>
    %203 = vector.extract_strided_slice %201 {offsets = [0, 32], sizes = [8, 32], strides = [1, 1]} : vector<8x128xf32> to vector<8x32xf32>
    %204 = vector.extract_strided_slice %201 {offsets = [0, 64], sizes = [8, 32], strides = [1, 1]} : vector<8x128xf32> to vector<8x32xf32>
    %205 = vector.extract_strided_slice %201 {offsets = [0, 96], sizes = [8, 32], strides = [1, 1]} : vector<8x128xf32> to vector<8x32xf32>
    %206 = arith.mulf %203, %185 : vector<8x32xf32>
    %207 = arith.mulf %202, %204 : vector<8x32xf32>
    %208 = arith.addf %206, %207 : vector<8x32xf32>
    %209 = math.tanh %208 : vector<8x32xf32>
    %210 = arith.mulf %205, %209 : vector<8x32xf32>
    %211 = arith.index_cast %191 : i32 to index
    %c0_63 = arith.constant 0 : index
    %212 = vector.load %arg6[%211, %c0_63] : memref<72x32xf32, #tpu.memory_space<vmem>>, vector<8x32xf32>
    tpu.vector_store %arg6[%211, %c0_63], %210 {strides = array<i32>} : memref<72x32xf32, #tpu.memory_space<vmem>>, vector<8x32xf32>,
    %c8_i32_64 = arith.constant 8 : i32
    %c64 = arith.constant 64 : index
    %c0_65 = arith.constant 0 : index
    %213 = vector.load %arg6[%c64, %c0_65] : memref<72x32xf32, #tpu.memory_space<vmem>>, vector<8x32xf32>
    tpu.vector_store %arg6[%c64, %c0_65], %208 {strides = array<i32>} : memref<72x32xf32, #tpu.memory_space<vmem>>, vector<8x32xf32>,
    return
  }
}

</mosaic_0001>

<llo_original>
// kernel: tpu_custom_call.1
$region0: #{tpu_custom_call.1}
  #allocation0 [shape = 'u32[]', space=smem, size = 0x4, offset = 0x4, fixed_abs, tag = 'smem constant byte address 0x4 - core index']
  #allocation1 [shape = 'u32[144,128]{1,0:T(1,128)}', space=vmem, size = 0x12000, scoped, tag = 'internal scratch']
  #allocation2 [shape = 'f32[64,128]{1,0:T(8,128)}', space=vmem, size = 0x8000, scoped, tag = 'scratch operand']
  %s0 = inlined_call_operand.vmem [shape: f32[64,16], index: 0, kind: input, shape index: {}]
  %s1 = inlined_call_operand.vmem [shape: f32[16,128], index: 1, kind: input, shape index: {}]
  %s2 = inlined_call_operand.vmem [shape: f32[32,128], index: 2, kind: input, shape index: {}]
  %s3 = inlined_call_operand.vmem [shape: f32[1,128], index: 3, kind: input, shape index: {}]
  %s4 = inlined_call_operand.vmem [shape: f32[8,32], index: 4, kind: input, shape index: {}]
  %s5 = inlined_call_operand.vmem [shape: f32[8,32], index: 5, kind: input, shape index: {}]
  %s6 = inlined_call_operand.vmem [shape: f32[72,32], index: 6, kind: output, shape index: {}]
  %s7 = sld [smem:[#allocation0]]
  $region34: #{tpu_custom_call.1} parent=0
    _
  %s9 = ssub.s32 1, %s7
  %s10 = scalar_select 0, %s9, %s7
  // Predicated region
  $region2: #{tpu_custom_call.1} parent=0 // pred_check
    _
  $region3: #{tpu_custom_call.1} parent=0 // pred_check_branch
    %12 = sbr.rel (0) target = $region5
  $region4: #{tpu_custom_call.1} parent=0 // pred_region
    _
  $region5: #{tpu_custom_call.1} parent=0 // pred_fallthru
    _
  // Predicated region
  $region6: #{tpu_custom_call.1} parent=0 // pred_check
    _
  $region7: #{tpu_custom_call.1} parent=0 // pred_check_branch
    %14 = sbr.rel (0) target = $region9
  $region8: #{tpu_custom_call.1} parent=0 // pred_region
    _
  $region9: #{tpu_custom_call.1} parent=0 // pred_fallthru
    _
  // Predicated region
  $region10: #{tpu_custom_call.1} parent=0 // pred_check
    _
  $region11: #{tpu_custom_call.1} parent=0 // pred_check_branch
    %16 = sbr.rel (0) target = $region13
  $region12: #{tpu_custom_call.1} parent=0 // pred_region
    _
  $region13: #{tpu_custom_call.1} parent=0 // pred_fallthru
    _
  // Predicated region
  $region14: #{tpu_custom_call.1} parent=0 // pred_check
    _
  $region15: #{tpu_custom_call.1} parent=0 // pred_check_branch
    %18 = sbr.rel (0) target = $region17
  $region16: #{tpu_custom_call.1} parent=0 // pred_region
    _
  $region17: #{tpu_custom_call.1} parent=0 // pred_fallthru
    _
  // Predicated region
  $region18: #{tpu_custom_call.1} parent=0 // pred_check
    _
  $region19: #{tpu_custom_call.1} parent=0 // pred_check_branch
    %20 = sbr.rel (0) target = $region21
  $region20: #{tpu_custom_call.1} parent=0 // pred_region
    _
  $region21: #{tpu_custom_call.1} parent=0 // pred_fallthru
    _
  // Predicated region
  $region22: #{tpu_custom_call.1} parent=0 // pred_check
    _
  $region23: #{tpu_custom_call.1} parent=0 // pred_check_branch
    %22 = sbr.rel (0) target = $region25
  $region24: #{tpu_custom_call.1} parent=0 // pred_region
    _
  $region25: #{tpu_custom_call.1} parent=0 // pred_fallthru
    _
  %v23 = vlaneseq
  %v24 = vand.u32 %v23, 127
  %vm25 = vcmp.ge.s32.totalorder %v24, 64
  %vm26 = vcmp.lt.s32.totalorder %v24, 96
  %vm27 = vmand %vm25, %vm26
  %v28 = vsel %vm27, 1.0, 0.5
  %v29 = vld [vmem:[%s0] sm:$0xff]
  %v30 = vld [vmem:[%s0 + $0x8] sm:$0xff]
  %v31 = vld [vmem:[%s0 + $0x10] sm:$0xff]
  %v32 = vld [vmem:[%s0 + $0x18] sm:$0xff]
  %v33 = vld [vmem:[%s0 + $0x20] sm:$0xff]
  %v34 = vld [vmem:[%s0 + $0x28] sm:$0xff]
  %v35 = vld [vmem:[%s0 + $0x30] sm:$0xff]
  %v36 = vld [vmem:[%s0 + $0x38] sm:$0xff]
  %v37 = vld [vmem:[%s1] sm:$0xff]
  %v38 = vld [vmem:[%s1 + $0x8] sm:$0xff]
  %v39 = vld [vmem:[%s3] sm:$0x1]
  %v41 = vlaneseq
  %v42 = vshrl.u32 %v41, 7
  %v43 = vsub.s32 0, %v42
  %v44 = vrot.slane %v39, %v43
  %vm46 = vcmask 130048
  %v48 = vsel %vm46, %v29, 0
  %v51 = vsel %vm46, %v30, 0
  %v54 = vsel %vm46, %v31, 0
  %v57 = vsel %vm46, %v32, 0
  %v60 = vsel %vm46, %v33, 0
  %v63 = vsel %vm46, %v34, 0
  %v66 = vsel %vm46, %v35, 0
  %v69 = vsel %vm46, %v36, 0
  %71 = vmatprep.subr.mxu0 0.0
  %72 = vmatpush1.msra.mxu0 0.0
  %73 = vmatprep.subr.mxu0 0.0
  %74 = vmatpush1.msra.mxu0 0.0
  %75 = vmatprep.subr.mxu0 0.0
  %76 = vmatpush1.msra.mxu0 0.0
  %77 = vmatprep.subr.mxu0 0.0
  %78 = vmatpush1.msra.mxu0 0.0
  %79 = vmatprep.subr.mxu0 0.0
  %80 = vmatpush1.msra.mxu0 0.0
  %81 = vmatprep.subr.mxu0 0.0
  %82 = vmatpush1.msra.mxu0 0.0
  %83 = vmatprep.subr.mxu0 0.0
  %84 = vmatpush1.msra.mxu0 0.0
  %85 = vmatprep.subr.mxu0 0.0
  %86 = vmatpush1.msra.mxu0 0.0
  %87 = vmatprep.subr.mxu0 0.0
  %88 = vmatpush1.msra.mxu0 0.0
  %89 = vmatprep.subr.mxu0 0.0
  %90 = vmatpush1.msra.mxu0 0.0
  %91 = vmatprep.subr.mxu0 0.0
  %92 = vmatpush1.msra.mxu0 0.0
  %93 = vmatprep.subr.mxu0 0.0
  %94 = vmatpush1.msra.mxu0 0.0
  %95 = vmatprep.subr.mxu0 0.0
  %96 = vmatpush1.msra.mxu0 0.0
  %97 = vmatprep.subr.mxu0 0.0
  %98 = vmatpush1.msra.mxu0 0.0
  %99 = vmatprep.subr.mxu0 0.0
  %100 = vmatpush1.msra.mxu0 %v38
  %101 = vmatprep.subr.mxu0 0.0
  %102 = vmatpush1.msra.mxu0 %v37
  %103 = vmatprep.subr.mxu0 0.0
  %104 = vmatpush2.msra.mxu0 0.0
  %105 = vmatprep.subr.mxu0 0.0
  %106 = vmatpush2.msra.mxu0 0.0
  %107 = vmatprep.subr.mxu0 0.0
  %108 = vmatpush2.msra.mxu0 0.0
  %109 = vmatprep.subr.mxu0 0.0
  %110 = vmatpush2.msra.mxu0 0.0
  %111 = vmatprep.subr.mxu0 0.0
  %112 = vmatpush2.msra.mxu0 0.0
  %113 = vmatprep.subr.mxu0 0.0
  %114 = vmatpush2.msra.mxu0 0.0
  %115 = vmatprep.subr.mxu0 0.0
  %116 = vmatpush2.msra.mxu0 0.0
  %117 = vmatprep.subr.mxu0 0.0
  %118 = vmatpush2.msra.mxu0 0.0
  %119 = vmatprep.subr.mxu0 0.0
  %120 = vmatpush2.msra.mxu0 0.0
  %121 = vmatprep.subr.mxu0 0.0
  %122 = vmatpush2.msra.mxu0 0.0
  %123 = vmatprep.subr.mxu0 0.0
  %124 = vmatpush2.msra.mxu0 0.0
  %125 = vmatprep.subr.mxu0 0.0
  %126 = vmatpush2.msra.mxu0 0.0
  %127 = vmatprep.subr.mxu0 0.0
  %128 = vmatpush2.msra.mxu0 0.0
  %129 = vmatprep.subr.mxu0 0.0
  %130 = vmatpush2.msra.mxu0 0.0
  %131 = vmatprep.subr.mxu0 0.0
  %132 = vmatpush2.msra.mxu0 0.0
  %133 = vmatprep.subr.mxu0 0.0
  %134 = vmatpush2.msra.mxu0 0.0
  %135 = vmatprep.mubr.f32.mxu0 0.0
  %136 = vmatmul.mubr.f32.gmra.mxu0 %v48
  %v137 = vpop.f32.mrf.mxu0
  %v138 = vadd.f32 %v44, %v137
  %v139 = vpop.f32.mrf.mxu0
  %140 = vmatprep.mubr.f32.mxu0 0.0
  %141 = vmatmul.mubr.f32.gmra.mxu0 %v51
  %v142 = vpop.f32.mrf.mxu0
  %v143 = vadd.f32 %v44, %v142
  %v144 = vpop.f32.mrf.mxu0
  %145 = vmatprep.mubr.f32.mxu0 0.0
  %146 = vmatmul.mubr.f32.gmra.mxu0 %v54
  %v147 = vpop.f32.mrf.mxu0
  %v148 = vadd.f32 %v44, %v147
  %v149 = vpop.f32.mrf.mxu0
  %150 = vmatprep.mubr.f32.mxu0 0.0
  %151 = vmatmul.mubr.f32.gmra.mxu0 %v57
  %v152 = vpop.f32.mrf.mxu0
  %v153 = vadd.f32 %v44, %v152
  %v154 = vpop.f32.mrf.mxu0
  %155 = vmatprep.mubr.f32.mxu0 0.0
  %156 = vmatmul.mubr.f32.gmra.mxu0 %v60
  %v157 = vpop.f32.mrf.mxu0
  %v158 = vadd.f32 %v44, %v157
  %v159 = vpop.f32.mrf.mxu0
  %160 = vmatprep.mubr.f32.mxu0 0.0
  %161 = vmatmul.mubr.f32.gmra.mxu0 %v63
  %v162 = vpop.f32.mrf.mxu0
  %v163 = vadd.f32 %v44, %v162
  %v164 = vpop.f32.mrf.mxu0
  %165 = vmatprep.mubr.f32.mxu0 0.0
  %166 = vmatmul.mubr.f32.gmra.mxu0 %v66
  %v167 = vpop.f32.mrf.mxu0
  %v168 = vadd.f32 %v44, %v167
  %v169 = vpop.f32.mrf.mxu0
  %170 = vmatprep.mubr.f32.mxu0 0.0
  %171 = vmatmul.mubr.f32.gmra.mxu0 %v69
  %v172 = vpop.f32.mrf.mxu0
  %v173 = vadd.f32 %v44, %v172
  %v174 = vpop.f32.mrf.mxu0
  %175 = vdwg.mxu0
  %v176 = vmul.f32 %v138, %v28
  %v177 = vmul.f32 %v143, %v28
  %v178 = vmul.f32 %v148, %v28
  %v179 = vmul.f32 %v153, %v28
  %v180 = vmul.f32 %v158, %v28
  %v181 = vmul.f32 %v163, %v28
  %v182 = vmul.f32 %v168, %v28
  %v183 = vmul.f32 %v173, %v28
  %184 = vst [vmem:[#allocation2] sm:$0xff] %v176
  %185 = vst [vmem:[#allocation2 + $0x8] sm:$0xff] %v177
  %186 = vst [vmem:[#allocation2 + $0x10] sm:$0xff] %v178
  %187 = vst [vmem:[#allocation2 + $0x18] sm:$0xff] %v179
  %188 = vst [vmem:[#allocation2 + $0x20] sm:$0xff] %v180
  %189 = vst [vmem:[#allocation2 + $0x28] sm:$0xff] %v181
  %190 = vst [vmem:[#allocation2 + $0x30] sm:$0xff] %v182
  %191 = vst [vmem:[#allocation2 + $0x38] sm:$0xff] %v183
  %v192 = vld [vmem:[%s2] sm:$0xff]
  %v193 = vld [vmem:[%s2 + $0x8] sm:$0xff]
  %v194 = vld [vmem:[%s2 + $0x10] sm:$0xff]
  %v195 = vld [vmem:[%s2 + $0x18] sm:$0xff]
  %v196 = vmul.f32 %v192, %v28
  %v197 = vmul.f32 %v193, %v28
  %v198 = vmul.f32 %v194, %v28
  %v199 = vmul.f32 %v195, %v28
  %v200 = vld [vmem:[%s4] sm:$0xff]
  %v201 = vld [vmem:[%s5] sm:$0xff]
  %v202 = vld [vmem:[#allocation2] sm:$0xff]
  %vm203 = vcmask 261120
  %v205 = vsel %vm203, %v200, 0
  %207 = vmatprep.subr.mxu0 0.0
  %208 = vmatpush1.msra.mxu0 0.0
  %209 = vmatprep.subr.mxu0 0.0
  %210 = vmatpush1.msra.mxu0 0.0
  %211 = vmatprep.subr.mxu0 0.0
  %212 = vmatpush1.msra.mxu0 0.0
  %213 = vmatprep.subr.mxu0 0.0
  %214 = vmatpush1.msra.mxu0 0.0
  %215 = vmatprep.subr.mxu0 0.0
  %216 = vmatpush1.msra.mxu0 0.0
  %217 = vmatprep.subr.mxu0 0.0
  %218 = vmatpush1.msra.mxu0 0.0
  %219 = vmatprep.subr.mxu0 0.0
  %220 = vmatpush1.msra.mxu0 0.0
  %221 = vmatprep.subr.mxu0 0.0
  %222 = vmatpush1.msra.mxu0 0.0
  %223 = vmatprep.subr.mxu0 0.0
  %224 = vmatpush1.msra.mxu0 0.0
  %225 = vmatprep.subr.mxu0 0.0
  %226 = vmatpush1.msra.mxu0 0.0
  %227 = vmatprep.subr.mxu0 0.0
  %228 = vmatpush1.msra.mxu0 0.0
  %229 = vmatprep.subr.mxu0 0.0
  %230 = vmatpush1.msra.mxu0 0.0
  %231 = vmatprep.subr.mxu0 0.0
  %232 = vmatpush1.msra.mxu0 %v199
  %233 = vmatprep.subr.mxu0 0.0
  %234 = vmatpush1.msra.mxu0 %v198
  %235 = vmatprep.subr.mxu0 0.0
  %236 = vmatpush1.msra.mxu0 %v197
  %237 = vmatprep.subr.mxu0 0.0
  %238 = vmatpush1.msra.mxu0 %v196
  %239 = vmatprep.subr.mxu0 0.0
  %240 = vmatpush2.msra.mxu0 0.0
  %241 = vmatprep.subr.mxu0 0.0
  %242 = vmatpush2.msra.mxu0 0.0
  %243 = vmatprep.subr.mxu0 0.0
  %244 = vmatpush2.msra.mxu0 0.0
  %245 = vmatprep.subr.mxu0 0.0
  %246 = vmatpush2.msra.mxu0 0.0
  %247 = vmatprep.subr.mxu0 0.0
  %248 = vmatpush2.msra.mxu0 0.0
  %249 = vmatprep.subr.mxu0 0.0
  %250 = vmatpush2.msra.mxu0 0.0
  %251 = vmatprep.subr.mxu0 0.0
  %252 = vmatpush2.msra.mxu0 0.0
  %253 = vmatprep.subr.mxu0 0.0
  %254 = vmatpush2.msra.mxu0 0.0
  %255 = vmatprep.subr.mxu0 0.0
  %256 = vmatpush2.msra.mxu0 0.0
  %257 = vmatprep.subr.mxu0 0.0
  %258 = vmatpush2.msra.mxu0 0.0
  %259 = vmatprep.subr.mxu0 0.0
  %260 = vmatpush2.msra.mxu0 0.0
  %261 = vmatprep.subr.mxu0 0.0
  %262 = vmatpush2.msra.mxu0 0.0
  %263 = vmatprep.subr.mxu0 0.0
  %264 = vmatpush2.msra.mxu0 0.0
  %265 = vmatprep.subr.mxu0 0.0
  %266 = vmatpush2.msra.mxu0 0.0
  %267 = vmatprep.subr.mxu0 0.0
  %268 = vmatpush2.msra.mxu0 0.0
  %269 = vmatprep.subr.mxu0 0.0
  %270 = vmatpush2.msra.mxu0 0.0
  %271 = vmatprep.mubr.f32.mxu0 0.0
  %272 = vmatmul.mubr.f32.gmra.mxu0 %v205
  %v273 = vpop.f32.mrf.mxu0
  %v274 = vadd.f32 0.0, %v273
  %v275 = vpop.f32.mrf.mxu0
  %276 = vdwg.mxu0
  %v277 = vadd.f32 %v202, %v274
  %v278 = vtanh.pop %v277
  %v279 = vadd.f32 %v278, 1.0
  %v280 = vmul.f32 %v279, 0.5
  %v281 = vsel %vm27, %v278, %v280
  %283 = vrot.lane.b32.xlu0 %v201, 32
  %v284 = vpop.permute.xlu0 %283
  %v286 = vmul.f32 %v281, %v284
  %288 = vrot.lane.b32.xlu0 %v281, 64
  %v289 = vpop.permute.xlu0 %288
  %v291 = vmul.f32 %v281, %v289
  %293 = vrot.lane.b32.xlu0 %v291, 32
  %v294 = vpop.permute.xlu0 %293
  %v296 = vadd.f32 %v286, %v294
  %v297 = vtanh.pop %v296
  %299 = vrot.lane.b32.xlu0 %v297, 64
  %v300 = vpop.permute.xlu0 %299
  %v302 = vmul.f32 %v281, %v300
  %304 = vrot.lane.b32.xlu0 %v302, 32
  %v305 = vpop.permute.xlu0 %304
  %307 = vst.msk [vmem:[%s6] sm:$0xff] %vm203, %v305
  %s308 = scalar_lea.vmem [#allocation2], 8
  %v309 = vld [vmem:[%s308] sm:$0xff]
  %v310 = vsel %vm203, %v305, 0
  %312 = vmatprep.subr.mxu0 0.0
  %313 = vmatpush1.msra.mxu0 0.0
  %314 = vmatprep.subr.mxu0 0.0
  %315 = vmatpush1.msra.mxu0 0.0
  %316 = vmatprep.subr.mxu0 0.0
  %317 = vmatpush1.msra.mxu0 0.0
  %318 = vmatprep.subr.mxu0 0.0
  %319 = vmatpush1.msra.mxu0 0.0
  %320 = vmatprep.subr.mxu0 0.0
  %321 = vmatpush1.msra.mxu0 0.0
  %322 = vmatprep.subr.mxu0 0.0
  %323 = vmatpush1.msra.mxu0 0.0
  %324 = vmatprep.subr.mxu0 0.0
  %325 = vmatpush1.msra.mxu0 0.0
  %326 = vmatprep.subr.mxu0 0.0
  %327 = vmatpush1.msra.mxu0 0.0
  %328 = vmatprep.subr.mxu0 0.0
  %329 = vmatpush1.msra.mxu0 0.0
  %330 = vmatprep.subr.mxu0 0.0
  %331 = vmatpush1.msra.mxu0 0.0
  %332 = vmatprep.subr.mxu0 0.0
  %333 = vmatpush1.msra.mxu0 0.0
  %334 = vmatprep.subr.mxu0 0.0
  %335 = vmatpush1.msra.mxu0 0.0
  %336 = vmatprep.subr.mxu0 0.0
  %337 = vmatpush1.msra.mxu0 %v199
  %338 = vmatprep.subr.mxu0 0.0
  %339 = vmatpush1.msra.mxu0 %v198
  %340 = vmatprep.subr.mxu0 0.0
  %341 = vmatpush1.msra.mxu0 %v197
  %342 = vmatprep.subr.mxu0 0.0
  %343 = vmatpush1.msra.mxu0 %v196
  %344 = vmatprep.subr.mxu0 0.0
  %345 = vmatpush2.msra.mxu0 0.0
  %346 = vmatprep.subr.mxu0 0.0
  %347 = vmatpush2.msra.mxu0 0.0
  %348 = vmatprep.subr.mxu0 0.0
  %349 = vmatpush2.msra.mxu0 0.0
  %350 = vmatprep.subr.mxu0 0.0
  %351 = vmatpush2.msra.mxu0 0.0
  %352 = vmatprep.subr.mxu0 0.0
  %353 = vmatpush2.msra.mxu0 0.0
  %354 = vmatprep.subr.mxu0 0.0
  %355 = vmatpush2.msra.mxu0 0.0
  %356 = vmatprep.subr.mxu0 0.0
  %357 = vmatpush2.msra.mxu0 0.0
  %358 = vmatprep.subr.mxu0 0.0
  %359 = vmatpush2.msra.mxu0 0.0
  %360 = vmatprep.subr.mxu0 0.0
  %361 = vmatpush2.msra.mxu0 0.0
  %362 = vmatprep.subr.mxu0 0.0
  %363 = vmatpush2.msra.mxu0 0.0
  %364 = vmatprep.subr.mxu0 0.0
  %365 = vmatpush2.msra.mxu0 0.0
  %366 = vmatprep.subr.mxu0 0.0
  %367 = vmatpush2.msra.mxu0 0.0
  %368 = vmatprep.subr.mxu0 0.0
  %369 = vmatpush2.msra.mxu0 0.0
  %370 = vmatprep.subr.mxu0 0.0
  %371 = vmatpush2.msra.mxu0 0.0
  %372 = vmatprep.subr.mxu0 0.0
  %373 = vmatpush2.msra.mxu0 0.0
  %374 = vmatprep.subr.mxu0 0.0
  %375 = vmatpush2.msra.mxu0 0.0
  %376 = vmatprep.mubr.f32.mxu0 0.0
  %377 = vmatmul.mubr.f32.gmra.mxu0 %v310
  %v378 = vpop.f32.mrf.mxu0
  %v379 = vadd.f32 0.0, %v378
  %v380 = vpop.f32.mrf.mxu0
  %381 = vdwg.mxu0
  %v382 = vadd.f32 %v309, %v379
  %v383 = vtanh.pop %v382
  %v384 = vadd.f32 %v383, 1.0
  %v385 = vmul.f32 %v384, 0.5
  %v386 = vsel %vm27, %v383, %v385
  %v387 = vmul.f32 %v386, %v296
  %389 = vrot.lane.b32.xlu0 %v386, 64
  %v390 = vpop.permute.xlu0 %389
  %v392 = vmul.f32 %v386, %v390
  %394 = vrot.lane.b32.xlu0 %v392, 32
  %v395 = vpop.permute.xlu0 %394
  %v397 = vadd.f32 %v387, %v395
  %v398 = vtanh.pop %v397
  %400 = vrot.lane.b32.xlu0 %v398, 64
  %v401 = vpop.permute.xlu0 %400
  %v403 = vmul.f32 %v386, %v401
  %405 = vrot.lane.b32.xlu0 %v403, 32
  %v406 = vpop.permute.xlu0 %405
  %s408 = scalar_lea.vmem %s6, 8
  %409 = vst.msk [vmem:[%s408] sm:$0xff] %vm203, %v406
  %s410 = scalar_lea.vmem [#allocation2], 16
  %v411 = vld [vmem:[%s410] sm:$0xff]
  %v412 = vsel %vm203, %v406, 0
  %414 = vmatprep.subr.mxu0 0.0
  %415 = vmatpush1.msra.mxu0 0.0
  %416 = vmatprep.subr.mxu0 0.0
  %417 = vmatpush1.msra.mxu0 0.0
  %418 = vmatprep.subr.mxu0 0.0
  %419 = vmatpush1.msra.mxu0 0.0
  %420 = vmatprep.subr.mxu0 0.0
  %421 = vmatpush1.msra.mxu0 0.0
  %422 = vmatprep.subr.mxu0 0.0
  %423 = vmatpush1.msra.mxu0 0.0
  %424 = vmatprep.subr.mxu0 0.0
  %425 = vmatpush1.msra.mxu0 0.0
  %426 = vmatprep.subr.mxu0 0.0
  %427 = vmatpush1.msra.mxu0 0.0
  %428 = vmatprep.subr.mxu0 0.0
  %429 = vmatpush1.msra.mxu0 0.0
  %430 = vmatprep.subr.mxu0 0.0
  %431 = vmatpush1.msra.mxu0 0.0
  %432 = vmatprep.subr.mxu0 0.0
  %433 = vmatpush1.msra.mxu0 0.0
  %434 = vmatprep.subr.mxu0 0.0
  %435 = vmatpush1.msra.mxu0 0.0
  %436 = vmatprep.subr.mxu0 0.0
  %437 = vmatpush1.msra.mxu0 0.0
  %438 = vmatprep.subr.mxu0 0.0
  %439 = vmatpush1.msra.mxu0 %v199
  %440 = vmatprep.subr.mxu0 0.0
  %441 = vmatpush1.msra.mxu0 %v198
  %442 = vmatprep.subr.mxu0 0.0
  %443 = vmatpush1.msra.mxu0 %v197
  %444 = vmatprep.subr.mxu0 0.0
  %445 = vmatpush1.msra.mxu0 %v196
  %446 = vmatprep.subr.mxu0 0.0
  %447 = vmatpush2.msra.mxu0 0.0
  %448 = vmatprep.subr.mxu0 0.0
  %449 = vmatpush2.msra.mxu0 0.0
  %450 = vmatprep.subr.mxu0 0.0
  %451 = vmatpush2.msra.mxu0 0.0
  %452 = vmatprep.subr.mxu0 0.0
  %453 = vmatpush2.msra.mxu0 0.0
  %454 = vmatprep.subr.mxu0 0.0
  %455 = vmatpush2.msra.mxu0 0.0
  %456 = vmatprep.subr.mxu0 0.0
  %457 = vmatpush2.msra.mxu0 0.0
  %458 = vmatprep.subr.mxu0 0.0
  %459 = vmatpush2.msra.mxu0 0.0
  %460 = vmatprep.subr.mxu0 0.0
  %461 = vmatpush2.msra.mxu0 0.0
  %462 = vmatprep.subr.mxu0 0.0
  %463 = vmatpush2.msra.mxu0 0.0
  %464 = vmatprep.subr.mxu0 0.0
  %465 = vmatpush2.msra.mxu0 0.0
  %466 = vmatprep.subr.mxu0 0.0
  %467 = vmatpush2.msra.mxu0 0.0
  %468 = vmatprep.subr.mxu0 0.0
  %469 = vmatpush2.msra.mxu0 0.0
  %470 = vmatprep.subr.mxu0 0.0
  %471 = vmatpush2.msra.mxu0 0.0
  %472 = vmatprep.subr.mxu0 0.0
  %473 = vmatpush2.msra.mxu0 0.0
  %474 = vmatprep.subr.mxu0 0.0
  %475 = vmatpush2.msra.mxu0 0.0
  %476 = vmatprep.subr.mxu0 0.0
  %477 = vmatpush2.msra.mxu0 0.0
  %478 = vmatprep.mubr.f32.mxu0 0.0
  %479 = vmatmul.mubr.f32.gmra.mxu0 %v412
  %v480 = vpop.f32.mrf.mxu0
  %v481 = vadd.f32 0.0, %v480
  %v482 = vpop.f32.mrf.mxu0
  %483 = vdwg.mxu0
  %v484 = vadd.f32 %v411, %v481
  %v485 = vtanh.pop %v484
  %v486 = vadd.f32 %v485, 1.0
  %v487 = vmul.f32 %v486, 0.5
  %v488 = vsel %vm27, %v485, %v487
  %v489 = vmul.f32 %v488, %v397
  %491 = vrot.lane.b32.xlu0 %v488, 64
  %v492 = vpop.permute.xlu0 %491
  %v494 = vmul.f32 %v488, %v492
  %496 = vrot.lane.b32.xlu0 %v494, 32
  %v497 = vpop.permute.xlu0 %496
  %v499 = vadd.f32 %v489, %v497
  %v500 = vtanh.pop %v499
  %502 = vrot.lane.b32.xlu0 %v500, 64
  %v503 = vpop.permute.xlu0 %502
  %v505 = vmul.f32 %v488, %v503
  %507 = vrot.lane.b32.xlu0 %v505, 32
  %v508 = vpop.permute.xlu0 %507
  %s510 = scalar_lea.vmem %s6, 16
  %511 = vst.msk [vmem:[%s510] sm:$0xff] %vm203, %v508
  %s512 = scalar_lea.vmem [#allocation2], 24
  %v513 = vld [vmem:[%s512] sm:$0xff]
  %v514 = vsel %vm203, %v508, 0
  %516 = vmatprep.subr.mxu0 0.0
  %517 = vmatpush1.msra.mxu0 0.0
  %518 = vmatprep.subr.mxu0 0.0
  %519 = vmatpush1.msra.mxu0 0.0
  %520 = vmatprep.subr.mxu0 0.0
  %521 = vmatpush1.msra.mxu0 0.0
  %522 = vmatprep.subr.mxu0 0.0
  %523 = vmatpush1.msra.mxu0 0.0
  %524 = vmatprep.subr.mxu0 0.0
  %525 = vmatpush1.msra.mxu0 0.0
  %526 = vmatprep.subr.mxu0 0.0
  %527 = vmatpush1.msra.mxu0 0.0
  %528 = vmatprep.subr.mxu0 0.0
  %529 = vmatpush1.msra.mxu0 0.0
  %530 = vmatprep.subr.mxu0 0.0
  %531 = vmatpush1.msra.mxu0 0.0
  %532 = vmatprep.subr.mxu0 0.0
  %533 = vmatpush1.msra.mxu0 0.0
  %534 = vmatprep.subr.mxu0 0.0
  %535 = vmatpush1.msra.mxu0 0.0
  %536 = vmatprep.subr.mxu0 0.0
  %537 = vmatpush1.msra.mxu0 0.0
  %538 = vmatprep.subr.mxu0 0.0
  %539 = vmatpush1.msra.mxu0 0.0
  %540 = vmatprep.subr.mxu0 0.0
  %541 = vmatpush1.msra.mxu0 %v199
  %542 = vmatprep.subr.mxu0 0.0
  %543 = vmatpush1.msra.mxu0 %v198
  %544 = vmatprep.subr.mxu0 0.0
  %545 = vmatpush1.msra.mxu0 %v197
  %546 = vmatprep.subr.mxu0 0.0
  %547 = vmatpush1.msra.mxu0 %v196
  %548 = vmatprep.subr.mxu0 0.0
  %549 = vmatpush2.msra.mxu0 0.0
  %550 = vmatprep.subr.mxu0 0.0
  %551 = vmatpush2.msra.mxu0 0.0
  %552 = vmatprep.subr.mxu0 0.0
  %553 = vmatpush2.msra.mxu0 0.0
  %554 = vmatprep.subr.mxu0 0.0
  %555 = vmatpush2.msra.mxu0 0.0
  %556 = vmatprep.subr.mxu0 0.0
  %557 = vmatpush2.msra.mxu0 0.0
  %558 = vmatprep.subr.mxu0 0.0
  %559 = vmatpush2.msra.mxu0 0.0
  %560 = vmatprep.subr.mxu0 0.0
  %561 = vmatpush2.msra.mxu0 0.0
  %562 = vmatprep.subr.mxu0 0.0
  %563 = vmatpush2.msra.mxu0 0.0
  %564 = vmatprep.subr.mxu0 0.0
  %565 = vmatpush2.msra.mxu0 0.0
  %566 = vmatprep.subr.mxu0 0.0
  %567 = vmatpush2.msra.mxu0 0.0
  %568 = vmatprep.subr.mxu0 0.0
  %569 = vmatpush2.msra.mxu0 0.0
  %570 = vmatprep.subr.mxu0 0.0
  %571 = vmatpush2.msra.mxu0 0.0
  %572 = vmatprep.subr.mxu0 0.0
  %573 = vmatpush2.msra.mxu0 0.0
  %574 = vmatprep.subr.mxu0 0.0
  %575 = vmatpush2.msra.mxu0 0.0
  %576 = vmatprep.subr.mxu0 0.0
  %577 = vmatpush2.msra.mxu0 0.0
  %578 = vmatprep.subr.mxu0 0.0
  %579 = vmatpush2.msra.mxu0 0.0
  %580 = vmatprep.mubr.f32.mxu0 0.0
  %581 = vmatmul.mubr.f32.gmra.mxu0 %v514
  %v582 = vpop.f32.mrf.mxu0
  %v583 = vadd.f32 0.0, %v582
  %v584 = vpop.f32.mrf.mxu0
  %585 = vdwg.mxu0
  %v586 = vadd.f32 %v513, %v583
  %v587 = vtanh.pop %v586
  %v588 = vadd.f32 %v587, 1.0
  %v589 = vmul.f32 %v588, 0.5
  %v590 = vsel %vm27, %v587, %v589
  %v591 = vmul.f32 %v590, %v499
  %593 = vrot.lane.b32.xlu0 %v590, 64
  %v594 = vpop.permute.xlu0 %593
  %v596 = vmul.f32 %v590, %v594
  %598 = vrot.lane.b32.xlu0 %v596, 32
  %v599 = vpop.permute.xlu0 %598
  %v601 = vadd.f32 %v591, %v599
  %v602 = vtanh.pop %v601
  %604 = vrot.lane.b32.xlu0 %v602, 64
  %v605 = vpop.permute.xlu0 %604
  %v607 = vmul.f32 %v590, %v605
  %609 = vrot.lane.b32.xlu0 %v607, 32
  %v610 = vpop.permute.xlu0 %609
  %s612 = scalar_lea.vmem %s6, 24
  %613 = vst.msk [vmem:[%s612] sm:$0xff] %vm203, %v610
  %s614 = scalar_lea.vmem [#allocation2], 32
  %v615 = vld [vmem:[%s614] sm:$0xff]
  %v616 = vsel %vm203, %v610, 0
  %618 = vmatprep.subr.mxu0 0.0
  %619 = vmatpush1.msra.mxu0 0.0
  %620 = vmatprep.subr.mxu0 0.0
  %621 = vmatpush1.msra.mxu0 0.0
  %622 = vmatprep.subr.mxu0 0.0
  %623 = vmatpush1.msra.mxu0 0.0
  %624 = vmatprep.subr.mxu0 0.0
  %625 = vmatpush1.msra.mxu0 0.0
  %626 = vmatprep.subr.mxu0 0.0
  %627 = vmatpush1.msra.mxu0 0.0
  %628 = vmatprep.subr.mxu0 0.0
  %629 = vmatpush1.msra.mxu0 0.0
  %630 = vmatprep.subr.mxu0 0.0
  %631 = vmatpush1.msra.mxu0 0.0
  %632 = vmatprep.subr.mxu0 0.0
  %633 = vmatpush1.msra.mxu0 0.0
  %634 = vmatprep.subr.mxu0 0.0
  %635 = vmatpush1.msra.mxu0 0.0
  %636 = vmatprep.subr.mxu0 0.0
  %637 = vmatpush1.msra.mxu0 0.0
  %638 = vmatprep.subr.mxu0 0.0
  %639 = vmatpush1.msra.mxu0 0.0
  %640 = vmatprep.subr.mxu0 0.0
  %641 = vmatpush1.msra.mxu0 0.0
  %642 = vmatprep.subr.mxu0 0.0
  %643 = vmatpush1.msra.mxu0 %v199
  %644 = vmatprep.subr.mxu0 0.0
  %645 = vmatpush1.msra.mxu0 %v198
  %646 = vmatprep.subr.mxu0 0.0
  %647 = vmatpush1.msra.mxu0 %v197
  %648 = vmatprep.subr.mxu0 0.0
  %649 = vmatpush1.msra.mxu0 %v196
  %650 = vmatprep.subr.mxu0 0.0
  %651 = vmatpush2.msra.mxu0 0.0
  %652 = vmatprep.subr.mxu0 0.0
  %653 = vmatpush2.msra.mxu0 0.0
  %654 = vmatprep.subr.mxu0 0.0
  %655 = vmatpush2.msra.mxu0 0.0
  %656 = vmatprep.subr.mxu0 0.0
  %657 = vmatpush2.msra.mxu0 0.0
  %658 = vmatprep.subr.mxu0 0.0
  %659 = vmatpush2.msra.mxu0 0.0
  %660 = vmatprep.subr.mxu0 0.0
  %661 = vmatpush2.msra.mxu0 0.0
  %662 = vmatprep.subr.mxu0 0.0
  %663 = vmatpush2.msra.mxu0 0.0
  %664 = vmatprep.subr.mxu0 0.0
  %665 = vmatpush2.msra.mxu0 0.0
  %666 = vmatprep.subr.mxu0 0.0
  %667 = vmatpush2.msra.mxu0 0.0
  %668 = vmatprep.subr.mxu0 0.0
  %669 = vmatpush2.msra.mxu0 0.0
  %670 = vmatprep.subr.mxu0 0.0
  %671 = vmatpush2.msra.mxu0 0.0
  %672 = vmatprep.subr.mxu0 0.0
  %673 = vmatpush2.msra.mxu0 0.0
  %674 = vmatprep.subr.mxu0 0.0
  %675 = vmatpush2.msra.mxu0 0.0
  %676 = vmatprep.subr.mxu0 0.0
  %677 = vmatpush2.msra.mxu0 0.0
  %678 = vmatprep.subr.mxu0 0.0
  %679 = vmatpush2.msra.mxu0 0.0
  %680 = vmatprep.subr.mxu0 0.0
  %681 = vmatpush2.msra.mxu0 0.0
  %682 = vmatprep.mubr.f32.mxu0 0.0
  %683 = vmatmul.mubr.f32.gmra.mxu0 %v616
  %v684 = vpop.f32.mrf.mxu0
  %v685 = vadd.f32 0.0, %v684
  %v686 = vpop.f32.mrf.mxu0
  %687 = vdwg.mxu0
  %v688 = vadd.f32 %v615, %v685
  %v689 = vtanh.pop %v688
  %v690 = vadd.f32 %v689, 1.0
  %v691 = vmul.f32 %v690, 0.5
  %v692 = vsel %vm27, %v689, %v691
  %v693 = vmul.f32 %v692, %v601
  %695 = vrot.lane.b32.xlu0 %v692, 64
  %v696 = vpop.permute.xlu0 %695
  %v698 = vmul.f32 %v692, %v696
  %700 = vrot.lane.b32.xlu0 %v698, 32
  %v701 = vpop.permute.xlu0 %700
  %v703 = vadd.f32 %v693, %v701
  %v704 = vtanh.pop %v703
  %706 = vrot.lane.b32.xlu0 %v704, 64
  %v707 = vpop.permute.xlu0 %706
  %v709 = vmul.f32 %v692, %v707
  %711 = vrot.lane.b32.xlu0 %v709, 32
  %v712 = vpop.permute.xlu0 %711
  %s714 = scalar_lea.vmem %s6, 32
  %715 = vst.msk [vmem:[%s714] sm:$0xff] %vm203, %v712
  %s716 = scalar_lea.vmem [#allocation2], 40
  %v717 = vld [vmem:[%s716] sm:$0xff]
  %v718 = vsel %vm203, %v712, 0
  %720 = vmatprep.subr.mxu0 0.0
  %721 = vmatpush1.msra.mxu0 0.0
  %722 = vmatprep.subr.mxu0 0.0
  %723 = vmatpush1.msra.mxu0 0.0
  %724 = vmatprep.subr.mxu0 0.0
  %725 = vmatpush1.msra.mxu0 0.0
  %726 = vmatprep.subr.mxu0 0.0
  %727 = vmatpush1.msra.mxu0 0.0
  %728 = vmatprep.subr.mxu0 0.0
  %729 = vmatpush1.msra.mxu0 0.0
  %730 = vmatprep.subr.mxu0 0.0
  %731 = vmatpush1.msra.mxu0 0.0
  %732 = vmatprep.subr.mxu0 0.0
  %733 = vmatpush1.msra.mxu0 0.0
  %734 = vmatprep.subr.mxu0 0.0
  %735 = vmatpush1.msra.mxu0 0.0
  %736 = vmatprep.subr.mxu0 0.0
  %737 = vmatpush1.msra.mxu0 0.0
  %738 = vmatprep.subr.mxu0 0.0
  %739 = vmatpush1.msra.mxu0 0.0
  %740 = vmatprep.subr.mxu0 0.0
  %741 = vmatpush1.msra.mxu0 0.0
  %742 = vmatprep.subr.mxu0 0.0
  %743 = vmatpush1.msra.mxu0 0.0
  %744 = vmatprep.subr.mxu0 0.0
  %745 = vmatpush1.msra.mxu0 %v199
  %746 = vmatprep.subr.mxu0 0.0
  %747 = vmatpush1.msra.mxu0 %v198
  %748 = vmatprep.subr.mxu0 0.0
  %749 = vmatpush1.msra.mxu0 %v197
  %750 = vmatprep.subr.mxu0 0.0
  %751 = vmatpush1.msra.mxu0 %v196
  %752 = vmatprep.subr.mxu0 0.0
  %753 = vmatpush2.msra.mxu0 0.0
  %754 = vmatprep.subr.mxu0 0.0
  %755 = vmatpush2.msra.mxu0 0.0
  %756 = vmatprep.subr.mxu0 0.0
  %757 = vmatpush2.msra.mxu0 0.0
  %758 = vmatprep.subr.mxu0 0.0
  %759 = vmatpush2.msra.mxu0 0.0
  %760 = vmatprep.subr.mxu0 0.0
  %761 = vmatpush2.msra.mxu0 0.0
  %762 = vmatprep.subr.mxu0 0.0
  %763 = vmatpush2.msra.mxu0 0.0
  %764 = vmatprep.subr.mxu0 0.0
  %765 = vmatpush2.msra.mxu0 0.0
  %766 = vmatprep.subr.mxu0 0.0
  %767 = vmatpush2.msra.mxu0 0.0
  %768 = vmatprep.subr.mxu0 0.0
  %769 = vmatpush2.msra.mxu0 0.0
  %770 = vmatprep.subr.mxu0 0.0
  %771 = vmatpush2.msra.mxu0 0.0
  %772 = vmatprep.subr.mxu0 0.0
  %773 = vmatpush2.msra.mxu0 0.0
  %774 = vmatprep.subr.mxu0 0.0
  %775 = vmatpush2.msra.mxu0 0.0
  %776 = vmatprep.subr.mxu0 0.0
  %777 = vmatpush2.msra.mxu0 0.0
  %778 = vmatprep.subr.mxu0 0.0
  %779 = vmatpush2.msra.mxu0 0.0
  %780 = vmatprep.subr.mxu0 0.0
  %781 = vmatpush2.msra.mxu0 0.0
  %782 = vmatprep.subr.mxu0 0.0
  %783 = vmatpush2.msra.mxu0 0.0
  %784 = vmatprep.mubr.f32.mxu0 0.0
  %785 = vmatmul.mubr.f32.gmra.mxu0 %v718
  %v786 = vpop.f32.mrf.mxu0
  %v787 = vadd.f32 0.0, %v786
  %v788 = vpop.f32.mrf.mxu0
  %789 = vdwg.mxu0
  %v790 = vadd.f32 %v717, %v787
  %v791 = vtanh.pop %v790
  %v792 = vadd.f32 %v791, 1.0
  %v793 = vmul.f32 %v792, 0.5
  %v794 = vsel %vm27, %v791, %v793
  %v795 = vmul.f32 %v794, %v703
  %797 = vrot.lane.b32.xlu0 %v794, 64
  %v798 = vpop.permute.xlu0 %797
  %v800 = vmul.f32 %v794, %v798
  %802 = vrot.lane.b32.xlu0 %v800, 32
  %v803 = vpop.permute.xlu0 %802
  %v805 = vadd.f32 %v795, %v803
  %v806 = vtanh.pop %v805
  %808 = vrot.lane.b32.xlu0 %v806, 64
  %v809 = vpop.permute.xlu0 %808
  %v811 = vmul.f32 %v794, %v809
  %813 = vrot.lane.b32.xlu0 %v811, 32
  %v814 = vpop.permute.xlu0 %813
  %s816 = scalar_lea.vmem %s6, 40
  %817 = vst.msk [vmem:[%s816] sm:$0xff] %vm203, %v814
  %s818 = scalar_lea.vmem [#allocation2], 48
  %v819 = vld [vmem:[%s818] sm:$0xff]
  %v820 = vsel %vm203, %v814, 0
  %822 = vmatprep.subr.mxu0 0.0
  %823 = vmatpush1.msra.mxu0 0.0
  %824 = vmatprep.subr.mxu0 0.0
  %825 = vmatpush1.msra.mxu0 0.0
  %826 = vmatprep.subr.mxu0 0.0
  %827 = vmatpush1.msra.mxu0 0.0
  %828 = vmatprep.subr.mxu0 0.0
  %829 = vmatpush1.msra.mxu0 0.0
  %830 = vmatprep.subr.mxu0 0.0
  %831 = vmatpush1.msra.mxu0 0.0
  %832 = vmatprep.subr.mxu0 0.0
  %833 = vmatpush1.msra.mxu0 0.0
  %834 = vmatprep.subr.mxu0 0.0
  %835 = vmatpush1.msra.mxu0 0.0
  %836 = vmatprep.subr.mxu0 0.0
  %837 = vmatpush1.msra.mxu0 0.0
  %838 = vmatprep.subr.mxu0 0.0
  %839 = vmatpush1.msra.mxu0 0.0
  %840 = vmatprep.subr.mxu0 0.0
  %841 = vmatpush1.msra.mxu0 0.0
  %842 = vmatprep.subr.mxu0 0.0
  %843 = vmatpush1.msra.mxu0 0.0
  %844 = vmatprep.subr.mxu0 0.0
  %845 = vmatpush1.msra.mxu0 0.0
  %846 = vmatprep.subr.mxu0 0.0
  %847 = vmatpush1.msra.mxu0 %v199
  %848 = vmatprep.subr.mxu0 0.0
  %849 = vmatpush1.msra.mxu0 %v198
  %850 = vmatprep.subr.mxu0 0.0
  %851 = vmatpush1.msra.mxu0 %v197
  %852 = vmatprep.subr.mxu0 0.0
  %853 = vmatpush1.msra.mxu0 %v196
  %854 = vmatprep.subr.mxu0 0.0
  %855 = vmatpush2.msra.mxu0 0.0
  %856 = vmatprep.subr.mxu0 0.0
  %857 = vmatpush2.msra.mxu0 0.0
  %858 = vmatprep.subr.mxu0 0.0
  %859 = vmatpush2.msra.mxu0 0.0
  %860 = vmatprep.subr.mxu0 0.0
  %861 = vmatpush2.msra.mxu0 0.0
  %862 = vmatprep.subr.mxu0 0.0
  %863 = vmatpush2.msra.mxu0 0.0
  %864 = vmatprep.subr.mxu0 0.0
  %865 = vmatpush2.msra.mxu0 0.0
  %866 = vmatprep.subr.mxu0 0.0
  %867 = vmatpush2.msra.mxu0 0.0
  %868 = vmatprep.subr.mxu0 0.0
  %869 = vmatpush2.msra.mxu0 0.0
  %870 = vmatprep.subr.mxu0 0.0
  %871 = vmatpush2.msra.mxu0 0.0
  %872 = vmatprep.subr.mxu0 0.0
  %873 = vmatpush2.msra.mxu0 0.0
  %874 = vmatprep.subr.mxu0 0.0
  %875 = vmatpush2.msra.mxu0 0.0
  %876 = vmatprep.subr.mxu0 0.0
  %877 = vmatpush2.msra.mxu0 0.0
  %878 = vmatprep.subr.mxu0 0.0
  %879 = vmatpush2.msra.mxu0 0.0
  %880 = vmatprep.subr.mxu0 0.0
  %881 = vmatpush2.msra.mxu0 0.0
  %882 = vmatprep.subr.mxu0 0.0
  %883 = vmatpush2.msra.mxu0 0.0
  %884 = vmatprep.subr.mxu0 0.0
  %885 = vmatpush2.msra.mxu0 0.0
  %886 = vmatprep.mubr.f32.mxu0 0.0
  %887 = vmatmul.mubr.f32.gmra.mxu0 %v820
  %v888 = vpop.f32.mrf.mxu0
  %v889 = vadd.f32 0.0, %v888
  %v890 = vpop.f32.mrf.mxu0
  %891 = vdwg.mxu0
  %v892 = vadd.f32 %v819, %v889
  %v893 = vtanh.pop %v892
  %v894 = vadd.f32 %v893, 1.0
  %v895 = vmul.f32 %v894, 0.5
  %v896 = vsel %vm27, %v893, %v895
  %v897 = vmul.f32 %v896, %v805
  %899 = vrot.lane.b32.xlu0 %v896, 64
  %v900 = vpop.permute.xlu0 %899
  %v902 = vmul.f32 %v896, %v900
  %904 = vrot.lane.b32.xlu0 %v902, 32
  %v905 = vpop.permute.xlu0 %904
  %v907 = vadd.f32 %v897, %v905
  %v908 = vtanh.pop %v907
  %910 = vrot.lane.b32.xlu0 %v908, 64
  %v911 = vpop.permute.xlu0 %910
  %v913 = vmul.f32 %v896, %v911
  %915 = vrot.lane.b32.xlu0 %v913, 32
  %v916 = vpop.permute.xlu0 %915
  %s918 = scalar_lea.vmem %s6, 48
  %919 = vst.msk [vmem:[%s918] sm:$0xff] %vm203, %v916
  %s920 = scalar_lea.vmem [#allocation2], 56
  %v921 = vld [vmem:[%s920] sm:$0xff]
  %v922 = vsel %vm203, %v916, 0
  %924 = vmatprep.subr.mxu0 0.0
  %925 = vmatpush1.msra.mxu0 0.0
  %926 = vmatprep.subr.mxu0 0.0
  %927 = vmatpush1.msra.mxu0 0.0
  %928 = vmatprep.subr.mxu0 0.0
  %929 = vmatpush1.msra.mxu0 0.0
  %930 = vmatprep.subr.mxu0 0.0
  %931 = vmatpush1.msra.mxu0 0.0
  %932 = vmatprep.subr.mxu0 0.0
  %933 = vmatpush1.msra.mxu0 0.0
  %934 = vmatprep.subr.mxu0 0.0
  %935 = vmatpush1.msra.mxu0 0.0
  %936 = vmatprep.subr.mxu0 0.0
  %937 = vmatpush1.msra.mxu0 0.0
  %938 = vmatprep.subr.mxu0 0.0
  %939 = vmatpush1.msra.mxu0 0.0
  %940 = vmatprep.subr.mxu0 0.0
  %941 = vmatpush1.msra.mxu0 0.0
  %942 = vmatprep.subr.mxu0 0.0
  %943 = vmatpush1.msra.mxu0 0.0
  %944 = vmatprep.subr.mxu0 0.0
  %945 = vmatpush1.msra.mxu0 0.0
  %946 = vmatprep.subr.mxu0 0.0
  %947 = vmatpush1.msra.mxu0 0.0
  %948 = vmatprep.subr.mxu0 0.0
  %949 = vmatpush1.msra.mxu0 %v199
  %950 = vmatprep.subr.mxu0 0.0
  %951 = vmatpush1.msra.mxu0 %v198
  %952 = vmatprep.subr.mxu0 0.0
  %953 = vmatpush1.msra.mxu0 %v197
  %954 = vmatprep.subr.mxu0 0.0
  %955 = vmatpush1.msra.mxu0 %v196
  %956 = vmatprep.subr.mxu0 0.0
  %957 = vmatpush2.msra.mxu0 0.0
  %958 = vmatprep.subr.mxu0 0.0
  %959 = vmatpush2.msra.mxu0 0.0
  %960 = vmatprep.subr.mxu0 0.0
  %961 = vmatpush2.msra.mxu0 0.0
  %962 = vmatprep.subr.mxu0 0.0
  %963 = vmatpush2.msra.mxu0 0.0
  %964 = vmatprep.subr.mxu0 0.0
  %965 = vmatpush2.msra.mxu0 0.0
  %966 = vmatprep.subr.mxu0 0.0
  %967 = vmatpush2.msra.mxu0 0.0
  %968 = vmatprep.subr.mxu0 0.0
  %969 = vmatpush2.msra.mxu0 0.0
  %970 = vmatprep.subr.mxu0 0.0
  %971 = vmatpush2.msra.mxu0 0.0
  %972 = vmatprep.subr.mxu0 0.0
  %973 = vmatpush2.msra.mxu0 0.0
  %974 = vmatprep.subr.mxu0 0.0
  %975 = vmatpush2.msra.mxu0 0.0
  %976 = vmatprep.subr.mxu0 0.0
  %977 = vmatpush2.msra.mxu0 0.0
  %978 = vmatprep.subr.mxu0 0.0
  %979 = vmatpush2.msra.mxu0 0.0
  %980 = vmatprep.subr.mxu0 0.0
  %981 = vmatpush2.msra.mxu0 0.0
  %982 = vmatprep.subr.mxu0 0.0
  %983 = vmatpush2.msra.mxu0 0.0
  %984 = vmatprep.subr.mxu0 0.0
  %985 = vmatpush2.msra.mxu0 0.0
  %986 = vmatprep.subr.mxu0 0.0
  %987 = vmatpush2.msra.mxu0 0.0
  %988 = vmatprep.mubr.f32.mxu0 0.0
  %989 = vmatmul.mubr.f32.gmra.mxu0 %v922
  %v990 = vpop.f32.mrf.mxu0
  %v991 = vadd.f32 0.0, %v990
  %v992 = vpop.f32.mrf.mxu0
  %993 = vdwg.mxu0
  %v994 = vadd.f32 %v921, %v991
  %v995 = vtanh.pop %v994
  %v996 = vadd.f32 %v995, 1.0
  %v997 = vmul.f32 %v996, 0.5
  %v998 = vsel %vm27, %v995, %v997
  %v999 = vmul.f32 %v998, %v907
  %1001 = vrot.lane.b32.xlu0 %v998, 64
  %v1002 = vpop.permute.xlu0 %1001
  %v1004 = vmul.f32 %v998, %v1002
  %1006 = vrot.lane.b32.xlu0 %v1004, 32
  %v1007 = vpop.permute.xlu0 %1006
  %v1009 = vadd.f32 %v999, %v1007
  %v1010 = vtanh.pop %v1009
  %1012 = vrot.lane.b32.xlu0 %v1010, 64
  %v1013 = vpop.permute.xlu0 %1012
  %v1015 = vmul.f32 %v998, %v1013
  %1017 = vrot.lane.b32.xlu0 %v1015, 32
  %v1018 = vpop.permute.xlu0 %1017
  %s1020 = scalar_lea.vmem %s6, 56
  %1021 = vst.msk [vmem:[%s1020] sm:$0xff] %vm203, %v1018
  %1023 = vrot.lane.b32.xlu0 %v1009, 96
  %v1024 = vpop.permute.xlu0 %1023
  %1026 = vst.msk [vmem:[%s6 + $0x40] sm:$0xff] %vm203, %v1024
  // Predicated region
  $region26: #{tpu_custom_call.1} parent=0 // pred_check
    _
  $region27: #{tpu_custom_call.1} parent=0 // pred_check_branch
    %1028 = sbr.rel (0) target = $region29
  $region28: #{tpu_custom_call.1} parent=0 // pred_region
    _
  $region29: #{tpu_custom_call.1} parent=0 // pred_fallthru
    _
  // Predicated region
  $region30: #{tpu_custom_call.1} parent=0 // pred_check
    _
  $region31: #{tpu_custom_call.1} parent=0 // pred_check_branch
    %1030 = sbr.rel (0) target = $region33
  $region32: #{tpu_custom_call.1} parent=0 // pred_region
    _
  $region33: #{tpu_custom_call.1} parent=0 // pred_fallthru
    _

</llo_original>
